<compile_context>
chip_gen: v5e
topology: v5e:2x2
jax: 0.10.0
libtpu: 0.0.40
codegen_flags: <defaults>
</compile_context>

<pallas_src>
import functools

import jax
import jax.numpy as jnp
from jax.experimental import pallas as pl
from jax.experimental.pallas import tpu as pltpu

HIDDEN = 768          # backbone hidden size -> nn.Linear(768, output_dim)
OUTPUT_DIM = 7        # args['output_dim']  (e.g. MELD 7 emotion classes)
LANE = 128            # TPU lane width (lane-dense output padding)


# ----------------------------------------------------------------------------
# Fused kernel: audio mean-pool + video mean-pool + linear1
#   grid = (B, n_tiles)  --  ("parallel", "arbitrary")
#   outputs are per-batch resident accumulators across the T-tile axis.
# ----------------------------------------------------------------------------
def _fused_kernel(text_ref, w_ref, b_ref, aud_ref, vid_ref,
                  tav_ref, aud_out_ref, vid_out_ref,
                  *, t_a, t_v, ta, tv, n_a, n_v, n_tiles):
    k = pl.program_id(1)

    @pl.when(k == 0)
    def _init():
        aud_out_ref[...] = jnp.zeros_like(aud_out_ref)
        vid_out_ref[...] = jnp.zeros_like(vid_out_ref)
        # linear1 computed once per batch row; bf16 operands on the MXU with
        # f32 accumulation + f32 bias.  Output tile is a full lane-dense
        # (1, 128) block (padded weight/bias columns are zero) -> unmasked vst.
        tav_ref[...] = (
            jnp.dot(text_ref[...], w_ref[...],
                    preferred_element_type=jnp.float32)
            + b_ref[...]
        ).astype(tav_ref.dtype)

    def _accum(x_ref, out_ref, tile, total, n_valid):
        def body():
            x = x_ref[...].astype(jnp.float32)
            if total % tile != 0:
                # Ragged last tile: mask out-of-range rows (no wrapper padding).
                pos = k * tile + jax.lax.broadcasted_iota(
                    jnp.int32, (tile, 1), 0)
                x = jnp.where(pos < total, x, 0.0)
            out_ref[...] += jnp.sum(x, axis=0, keepdims=True)

        if n_valid == n_tiles:
            body()                       # stream spans the whole grid: no gate
        else:
            # Shorter stream: its index_map is clamped (block stays resident,
            # no new DMA) and compute is skipped once it is exhausted.
            pl.when(k < n_valid)(body)

    _accum(aud_ref, aud_out_ref, t_a, ta, n_a)
    _accum(vid_ref, vid_out_ref, t_v, tv, n_v)

    @pl.when(k == n_tiles - 1)
    def _finalize():
        aud_out_ref[...] = aud_out_ref[...] * (1.0 / ta)
        vid_out_ref[...] = vid_out_ref[...] * (1.0 / tv)


# ----------------------------------------------------------------------------
# TAVEncoder forward (Pallas-backed)
# ----------------------------------------------------------------------------
def tav_encoder_forward(text_pooled, audio_hidden, video_hidden, w1, b1,
                        *, t_tile=512, vmem_limit_bytes=None):
    """
    text_pooled : (B, 768)      -- bert pooled output  (frozen backbone, synthetic)
    audio_hidden: (B, Ta, 768)  -- wav2vec2 last_hidden_state (synthetic)
    video_hidden: (B, Tv, 768)  -- videomae last_hidden_state (synthetic)
    w1          : (768, out_dim)   (transposed PyTorch weight)
    b1          : (out_dim,)
    Returns (tav (B, out_dim), aud_pool (B, 768), vid_pool (B, 768)).
    """
    B, Ta, H = audio_hidden.shape
    Bv, Tv, Hv = video_hidden.shape
    assert (B, H) == text_pooled.shape and (Bv, Hv) == (B, H)
    assert t_tile % 8 == 0, "t_tile must be a multiple of 8 (sublane packing)"
    D = w1.shape[1]

    # Per-stream tile sizes: clamp to the sequence length so a short stream
    # never requests a block larger than its array (block == full dim is legal).
    t_a = min(t_tile, Ta)
    t_v = min(t_tile, Tv)
    n_a = pl.cdiv(Ta, t_a)
    n_v = pl.cdiv(Tv, t_v)
    n_tiles = max(n_a, n_v)

    # Lane-dense padded linear output (slice back to D in the wrapper).
    # bf16 weights: MXU-native, halves the resident weight footprint.
    d_pad = LANE * pl.cdiv(D, LANE)
    w_pad = jnp.zeros((H, d_pad), jnp.bfloat16).at[:, :D].set(
        w1.astype(jnp.bfloat16))
    b_pad = jnp.zeros((1, d_pad), jnp.float32).at[:, :D].set(
        b1.reshape(1, D).astype(jnp.float32))
    text3 = text_pooled.astype(jnp.bfloat16).reshape(B, 1, H)

    # Right-size the VMEM budget from the actual working set (+ headroom)
    # so it fits v7x's 64 MiB physical VMEM with room to spare.
    if vmem_limit_bytes is None:
        stream_bytes = 2 * H * (t_a * audio_hidden.dtype.itemsize
                                + t_v * video_hidden.dtype.itemsize)  # 2 bufs
        const_bytes = 2 * (H * d_pad * 2 + d_pad * 4 + H * 2)
        out_bytes = 2 * (d_pad + 2 * H) * 4
        vmem_limit_bytes = int(1.5 * (stream_bytes + const_bytes + out_bytes))
        vmem_limit_bytes = max(vmem_limit_bytes + (4 << 20), 16 << 20)

    kernel = functools.partial(
        _fused_kernel,
        t_a=t_a, t_v=t_v, ta=Ta, tv=Tv, n_a=n_a, n_v=n_v, n_tiles=n_tiles)

    tav_pad, aud_pool, vid_pool = pl.pallas_call(
        kernel,
        out_shape=(
            jax.ShapeDtypeStruct((B, 1, d_pad), jnp.float32),
            jax.ShapeDtypeStruct((B, 1, H), jnp.float32),
            jax.ShapeDtypeStruct((B, 1, H), jnp.float32),
        ),
        grid_spec=pltpu.PrefetchScalarGridSpec(
            num_scalar_prefetch=0,
            grid=(B, n_tiles),
            in_specs=[
                pl.BlockSpec((None, 1, H), lambda b, k: (b, 0, 0)),     # text
                pl.BlockSpec((H, d_pad), lambda b, k: (0, 0)),          # w (bf16)
                pl.BlockSpec((1, d_pad), lambda b, k: (0, 0)),          # bias
                pl.BlockSpec((None, t_a, H),                            # audio
                             lambda b, k, na=n_a: (b, jnp.minimum(k, na - 1), 0)),
                pl.BlockSpec((None, t_v, H),                            # video
                             lambda b, k, nv=n_v: (b, jnp.minimum(k, nv - 1), 0)),
            ],
            out_specs=[
                pl.BlockSpec((None, 1, d_pad), lambda b, k: (b, 0, 0)),  # tav
                pl.BlockSpec((None, 1, H), lambda b, k: (b, 0, 0)),      # aud acc
                pl.BlockSpec((None, 1, H), lambda b, k: (b, 0, 0)),      # vid acc
            ],
        ),
        compiler_params=pltpu.CompilerParams(
            dimension_semantics=("parallel", "arbitrary"),  # batch || , T-tile reduce
            vmem_limit_bytes=vmem_limit_bytes,
        ),
    )(text3, w_pad, b_pad, audio_hidden, video_hidden)

    return tav_pad[:, 0, :D], aud_pool[:, 0, :], vid_pool[:, 0, :]


if __name__ == "__main__":
    key = jax.random.PRNGKey(0)
    k_text, k_aud, k_vid, k_w, k_b = jax.random.split(key, 5)

    B = 2         # batch
    T_AUD = 40    # wav2vec2 sequence length (small; ragged vs tile)
    T_VID = 24    # videomae token sequence length (small; ragged vs tile)

    # Synthetic frozen-backbone outputs (deterministic).
    text_pooled = jax.random.normal(k_text, (B, HIDDEN), dtype=jnp.float32)
    audio_hidden = jax.random.normal(k_aud, (B, T_AUD, HIDDEN), dtype=jnp.float32)
    video_hidden = jax.random.normal(k_vid, (B, T_VID, HIDDEN), dtype=jnp.float32)

    # Deterministic linear1 parameters (PyTorch stores (out, in); we store W^T).
    w1 = (jax.random.normal(k_w, (HIDDEN, OUTPUT_DIM), dtype=jnp.float32)
          * (1.0 / jnp.sqrt(HIDDEN)))
    b1 = jax.random.normal(k_b, (OUTPUT_DIM,), dtype=jnp.float32) * 0.01

    tav, aud_pool, vid_pool = tav_encoder_forward(
        text_pooled, audio_hidden, video_hidden, w1, b1)
    jax.block_until_ready((tav, aud_pool, vid_pool))

    # Reference: pooling is exact f32 (no bf16 cast anymore); linear1 uses the
    # same bf16 operands / f32 accumulation as the kernel's MXU path.
    tav_ref = (jnp.dot(text_pooled.astype(jnp.bfloat16),
                       w1.astype(jnp.bfloat16),
                       preferred_element_type=jnp.float32)
               + b1[None, :])
    aud_ref = jnp.mean(audio_hidden, axis=1)
    vid_ref = jnp.mean(video_hidden, axis=1)

    assert tav.shape == (B, OUTPUT_DIM)
    assert jnp.allclose(tav, tav_ref, rtol=1e-3, atol=1e-3), "linear1 mismatch"
    assert jnp.allclose(aud_pool, aud_ref, rtol=1e-4, atol=1e-4), \
        "audio mean-pool mismatch"
    assert jnp.allclose(vid_pool, vid_ref, rtol=1e-4, atol=1e-4), \
        "video mean-pool mismatch"

    print("KERNEL_OK")
</pallas_src>

<mosaic_0001>
module attributes {stable_mosaic.version = 11 : i64} {
  func.func @_fused_kernel(%arg0: i32, %arg1: i32, %arg2: memref<1x1x768xbf16, #tpu.memory_space<vmem>>, %arg3: memref<768x128xbf16, #tpu.memory_space<vmem>>, %arg4: memref<1x128xf32, #tpu.memory_space<vmem>>, %arg5: memref<1x40x768xf32, #tpu.memory_space<vmem>>, %arg6: memref<1x24x768xf32, #tpu.memory_space<vmem>>, %arg7: memref<1x1x128xf32, #tpu.memory_space<vmem>>, %arg8: memref<1x1x768xf32, #tpu.memory_space<vmem>>, %arg9: memref<1x1x768xf32, #tpu.memory_space<vmem>>) attributes {dimension_semantics = [#tpu.dimension_semantics<parallel>, #tpu.dimension_semantics<arbitrary>], iteration_bounds = array<i64: 2, 1>, scalar_prefetch = 0 : i64, scratch_operands = 0 : i64, tpu.core_type = #tpu.core_type<tc>, window_params = [{transform_indices = @transform_0, window_bounds = array<i64: 1, 1, 768>}, {pipeline_mode = #tpu.pipeline_mode<synchronous>, transform_indices = @transform_1, window_bounds = array<i64: 768, 128>}, {pipeline_mode = #tpu.pipeline_mode<synchronous>, transform_indices = @transform_2, window_bounds = array<i64: 1, 128>}, {transform_indices = @transform_3, window_bounds = array<i64: 1, 40, 768>}, {transform_indices = @transform_4, window_bounds = array<i64: 1, 24, 768>}, {transform_indices = @transform_5, window_bounds = array<i64: 1, 1, 128>}, {transform_indices = @transform_6, window_bounds = array<i64: 1, 1, 768>}, {transform_indices = @transform_7, window_bounds = array<i64: 1, 1, 768>}]} {
    %c0_i32 = arith.constant 0 : i32
    %0 = arith.cmpi eq, %arg1, %c0_i32 : i32
    %1 = arith.extui %0 : i1 to i32
    %c0_i32_0 = arith.constant 0 : i32
    %2 = arith.cmpi ne, %1, %c0_i32_0 : i32
    scf.if %2 {
      %cst_21 = arith.constant 0.000000e+00 : f32
      %26 = vector.broadcast %cst_21 : f32 to vector<1x768xf32>
      %c0_22 = arith.constant 0 : index
      %c0_23 = arith.constant 0 : index
      %c0_24 = arith.constant 0 : index
      %27 = vector.load %arg8[%c0_22, %c0_23, %c0_24] : memref<1x1x768xf32, #tpu.memory_space<vmem>>, vector<1x1x768xf32>
      %28 = vector.shape_cast %27 : vector<1x1x768xf32> to vector<1x768xf32>
      %29 = vector.shape_cast %26 : vector<1x768xf32> to vector<1x1x768xf32>
      tpu.vector_store %arg8[%c0_22, %c0_23, %c0_24], %29 {strides = array<i32>} : memref<1x1x768xf32, #tpu.memory_space<vmem>>, vector<1x1x768xf32>,
      %cst_25 = arith.constant 0.000000e+00 : f32
      %30 = vector.broadcast %cst_25 : f32 to vector<1x768xf32>
      %c0_26 = arith.constant 0 : index
      %c0_27 = arith.constant 0 : index
      %c0_28 = arith.constant 0 : index
      %31 = vector.load %arg9[%c0_26, %c0_27, %c0_28] : memref<1x1x768xf32, #tpu.memory_space<vmem>>, vector<1x1x768xf32>
      %32 = vector.shape_cast %31 : vector<1x1x768xf32> to vector<1x768xf32>
      %33 = vector.shape_cast %30 : vector<1x768xf32> to vector<1x1x768xf32>
      tpu.vector_store %arg9[%c0_26, %c0_27, %c0_28], %33 {strides = array<i32>} : memref<1x1x768xf32, #tpu.memory_space<vmem>>, vector<1x1x768xf32>,
      %c0_29 = arith.constant 0 : index
      %c0_30 = arith.constant 0 : index
      %c0_31 = arith.constant 0 : index
      %34 = vector.load %arg2[%c0_29, %c0_30, %c0_31] : memref<1x1x768xbf16, #tpu.memory_space<vmem>>, vector<1x1x768xbf16>
      %35 = vector.shape_cast %34 : vector<1x1x768xbf16> to vector<1x768xbf16>
      %c0_32 = arith.constant 0 : index
      %c0_33 = arith.constant 0 : index
      %36 = vector.load %arg3[%c0_32, %c0_33] : memref<768x128xbf16, #tpu.memory_space<vmem>>, vector<768x128xbf16>
      %cst_34 = arith.constant dense<0.000000e+00> : vector<1x128xf32>
      %37 = tpu.matmul %35, %36, %cst_34 {dimension_numbers = #tpu.dot_dimension_numbers<[1], [0], [0], [1], [0, 0, 1, 1], [], []>} : vector<1x768xbf16>, vector<768x128xbf16>, vector<1x128xf32> -> vector<1x128xf32>
      %c0_35 = arith.constant 0 : index
      %c0_36 = arith.constant 0 : index
      %38 = vector.load %arg4[%c0_35, %c0_36] : memref<1x128xf32, #tpu.memory_space<vmem>>, vector<1x128xf32>
      %39 = arith.addf %37, %38 : vector<1x128xf32>
      %c0_37 = arith.constant 0 : index
      %c0_38 = arith.constant 0 : index
      %c0_39 = arith.constant 0 : index
      %40 = vector.load %arg7[%c0_37, %c0_38, %c0_39] : memref<1x1x128xf32, #tpu.memory_space<vmem>>, vector<1x1x128xf32>
      %41 = vector.shape_cast %40 : vector<1x1x128xf32> to vector<1x128xf32>
      %42 = vector.shape_cast %39 : vector<1x128xf32> to vector<1x1x128xf32>
      tpu.vector_store %arg7[%c0_37, %c0_38, %c0_39], %42 {strides = array<i32>} : memref<1x1x128xf32, #tpu.memory_space<vmem>>, vector<1x1x128xf32>,
    } else {
    }
    %c0 = arith.constant 0 : index
    %c0_1 = arith.constant 0 : index
    %c0_2 = arith.constant 0 : index
    %3 = vector.load %arg5[%c0, %c0_1, %c0_2] : memref<1x40x768xf32, #tpu.memory_space<vmem>>, vector<1x40x768xf32>
    %4 = vector.shape_cast %3 : vector<1x40x768xf32> to vector<40x768xf32>
    %c0_3 = arith.constant 0 : index
    %c0_4 = arith.constant 0 : index
    %c0_5 = arith.constant 0 : index
    %5 = vector.load %arg8[%c0_3, %c0_4, %c0_5] : memref<1x1x768xf32, #tpu.memory_space<vmem>>, vector<1x1x768xf32>
    %6 = vector.shape_cast %5 : vector<1x1x768xf32> to vector<1x768xf32>
    %cst = arith.constant dense<0.000000e+00> : vector<768xf32>
    %7 = vector.multi_reduction <add>, %4, %cst [0] : vector<40x768xf32> to vector<768xf32>
    %8 = vector.shape_cast %7 : vector<768xf32> to vector<1x768xf32>
    %9 = arith.addf %6, %8 : vector<1x768xf32>
    %c0_6 = arith.constant 0 : index
    %c0_7 = arith.constant 0 : index
    %c0_8 = arith.constant 0 : index
    %10 = vector.load %arg8[%c0_6, %c0_7, %c0_8] : memref<1x1x768xf32, #tpu.memory_space<vmem>>, vector<1x1x768xf32>
    %11 = vector.shape_cast %10 : vector<1x1x768xf32> to vector<1x768xf32>
    %12 = vector.shape_cast %9 : vector<1x768xf32> to vector<1x1x768xf32>
    tpu.vector_store %arg8[%c0_6, %c0_7, %c0_8], %12 {strides = array<i32>} : memref<1x1x768xf32, #tpu.memory_space<vmem>>, vector<1x1x768xf32>,
    %c0_9 = arith.constant 0 : index
    %c0_10 = arith.constant 0 : index
    %c0_11 = arith.constant 0 : index
    %13 = vector.load %arg6[%c0_9, %c0_10, %c0_11] : memref<1x24x768xf32, #tpu.memory_space<vmem>>, vector<1x24x768xf32>
    %14 = vector.shape_cast %13 : vector<1x24x768xf32> to vector<24x768xf32>
    %c0_12 = arith.constant 0 : index
    %c0_13 = arith.constant 0 : index
    %c0_14 = arith.constant 0 : index
    %15 = vector.load %arg9[%c0_12, %c0_13, %c0_14] : memref<1x1x768xf32, #tpu.memory_space<vmem>>, vector<1x1x768xf32>
    %16 = vector.shape_cast %15 : vector<1x1x768xf32> to vector<1x768xf32>
    %cst_15 = arith.constant dense<0.000000e+00> : vector<768xf32>
    %17 = vector.multi_reduction <add>, %14, %cst_15 [0] : vector<24x768xf32> to vector<768xf32>
    %18 = vector.shape_cast %17 : vector<768xf32> to vector<1x768xf32>
    %19 = arith.addf %16, %18 : vector<1x768xf32>
    %c0_16 = arith.constant 0 : index
    %c0_17 = arith.constant 0 : index
    %c0_18 = arith.constant 0 : index
    %20 = vector.load %arg9[%c0_16, %c0_17, %c0_18] : memref<1x1x768xf32, #tpu.memory_space<vmem>>, vector<1x1x768xf32>
    %21 = vector.shape_cast %20 : vector<1x1x768xf32> to vector<1x768xf32>
    %22 = vector.shape_cast %19 : vector<1x768xf32> to vector<1x1x768xf32>
    tpu.vector_store %arg9[%c0_16, %c0_17, %c0_18], %22 {strides = array<i32>} : memref<1x1x768xf32, #tpu.memory_space<vmem>>, vector<1x1x768xf32>,
    %c0_i32_19 = arith.constant 0 : i32
    %23 = arith.cmpi eq, %arg1, %c0_i32_19 : i32
    %24 = arith.extui %23 : i1 to i32
    %c0_i32_20 = arith.constant 0 : i32
    %25 = arith.cmpi ne, %24, %c0_i32_20 : i32
    scf.if %25 {
      %c0_21 = arith.constant 0 : index
      %c0_22 = arith.constant 0 : index
      %c0_23 = arith.constant 0 : index
      %26 = vector.load %arg8[%c0_21, %c0_22, %c0_23] : memref<1x1x768xf32, #tpu.memory_space<vmem>>, vector<1x1x768xf32>
      %27 = vector.shape_cast %26 : vector<1x1x768xf32> to vector<1x768xf32>
      %cst_24 = arith.constant 2.500000e-02 : f32
      %28 = vector.broadcast %cst_24 : f32 to vector<1x768xf32>
      %29 = arith.mulf %27, %28 : vector<1x768xf32>
      %c0_25 = arith.constant 0 : index
      %c0_26 = arith.constant 0 : index
      %c0_27 = arith.constant 0 : index
      %30 = vector.load %arg8[%c0_25, %c0_26, %c0_27] : memref<1x1x768xf32, #tpu.memory_space<vmem>>, vector<1x1x768xf32>
      %31 = vector.shape_cast %30 : vector<1x1x768xf32> to vector<1x768xf32>
      %32 = vector.shape_cast %29 : vector<1x768xf32> to vector<1x1x768xf32>
      tpu.vector_store %arg8[%c0_25, %c0_26, %c0_27], %32 {strides = array<i32>} : memref<1x1x768xf32, #tpu.memory_space<vmem>>, vector<1x1x768xf32>,
      %c0_28 = arith.constant 0 : index
      %c0_29 = arith.constant 0 : index
      %c0_30 = arith.constant 0 : index
      %33 = vector.load %arg9[%c0_28, %c0_29, %c0_30] : memref<1x1x768xf32, #tpu.memory_space<vmem>>, vector<1x1x768xf32>
      %34 = vector.shape_cast %33 : vector<1x1x768xf32> to vector<1x768xf32>
      %cst_31 = arith.constant 0.0416666679 : f32
      %35 = vector.broadcast %cst_31 : f32 to vector<1x768xf32>
      %36 = arith.mulf %34, %35 : vector<1x768xf32>
      %c0_32 = arith.constant 0 : index
      %c0_33 = arith.constant 0 : index
      %c0_34 = arith.constant 0 : index
      %37 = vector.load %arg9[%c0_32, %c0_33, %c0_34] : memref<1x1x768xf32, #tpu.memory_space<vmem>>, vector<1x1x768xf32>
      %38 = vector.shape_cast %37 : vector<1x1x768xf32> to vector<1x768xf32>
      %39 = vector.shape_cast %36 : vector<1x768xf32> to vector<1x1x768xf32>
      tpu.vector_store %arg9[%c0_32, %c0_33, %c0_34], %39 {strides = array<i32>} : memref<1x1x768xf32, #tpu.memory_space<vmem>>, vector<1x1x768xf32>,
    } else {
    }
    return
  }
  func.func @transform_0(%arg0: i32, %arg1: i32) -> (i32, i32, i32) {
    %c0_i32 = arith.constant 0 : i32
    %c0_i32_0 = arith.constant 0 : i32
    %c0_i32_1 = arith.constant 0 : i32
    return %arg0, %c0_i32, %c0_i32_0 : i32, i32, i32
  }
  func.func @transform_1(%arg0: i32, %arg1: i32) -> (i32, i32) {
    %c0_i32 = arith.constant 0 : i32
    %c0_i32_0 = arith.constant 0 : i32
    %c0_i32_1 = arith.constant 0 : i32
    return %c0_i32, %c0_i32_0 : i32, i32
  }
  func.func @transform_2(%arg0: i32, %arg1: i32) -> (i32, i32) {
    %c0_i32 = arith.constant 0 : i32
    %c0_i32_0 = arith.constant 0 : i32
    %c0_i32_1 = arith.constant 0 : i32
    return %c0_i32, %c0_i32_0 : i32, i32
  }
  func.func @transform_3(%arg0: i32, %arg1: i32) -> (i32, i32, i32) {
    %c0_i32 = arith.constant 0 : i32
    %0 = arith.minsi %arg1, %c0_i32 : i32
    %c0_i32_0 = arith.constant 0 : i32
    %c0_i32_1 = arith.constant 0 : i32
    return %arg0, %0, %c0_i32_0 : i32, i32, i32
  }
  func.func @transform_4(%arg0: i32, %arg1: i32) -> (i32, i32, i32) {
    %c0_i32 = arith.constant 0 : i32
    %0 = arith.minsi %arg1, %c0_i32 : i32
    %c0_i32_0 = arith.constant 0 : i32
    %c0_i32_1 = arith.constant 0 : i32
    return %arg0, %0, %c0_i32_0 : i32, i32, i32
  }
  func.func @transform_5(%arg0: i32, %arg1: i32) -> (i32, i32, i32) {
    %c0_i32 = arith.constant 0 : i32
    %c0_i32_0 = arith.constant 0 : i32
    %c0_i32_1 = arith.constant 0 : i32
    return %arg0, %c0_i32, %c0_i32_0 : i32, i32, i32
  }
  func.func @transform_6(%arg0: i32, %arg1: i32) -> (i32, i32, i32) {
    %c0_i32 = arith.constant 0 : i32
    %c0_i32_0 = arith.constant 0 : i32
    %c0_i32_1 = arith.constant 0 : i32
    return %arg0, %c0_i32, %c0_i32_0 : i32, i32, i32
  }
  func.func @transform_7(%arg0: i32, %arg1: i32) -> (i32, i32, i32) {
    %c0_i32 = arith.constant 0 : i32
    %c0_i32_0 = arith.constant 0 : i32
    %c0_i32_1 = arith.constant 0 : i32
    return %arg0, %c0_i32, %c0_i32_0 : i32, i32, i32
  }
}

</mosaic_0001>

<llo_original>
// kernel: tpu_custom_call.1
$region0: #{tpu_custom_call.1}
  #allocation0 [shape = 'u32[]', space=smem, size = 0x4, offset = 0x4, fixed_abs, tag = 'smem constant byte address 0x4 - core index']
  #allocation1 [shape = 'u32[72,128]{1,0:T(1,128)}', space=vmem, size = 0x9000, scoped, tag = 'internal scratch']
  %s0 = inlined_call_operand.vmem [shape: bf16[2,1,768], index: 0, kind: input, shape index: {}]
  %s1 = inlined_call_operand.hbm [shape: bf16[768,128], index: 1, kind: input, shape index: {}]
  %s2 = inlined_call_operand.vmem [shape: f32[1,128], index: 2, kind: input, shape index: {}]
  %s3 = inlined_call_operand.hbm [shape: f32[2,40,768], index: 3, kind: input, shape index: {}]
  %s4 = inlined_call_operand.hbm [shape: f32[2,24,768], index: 4, kind: input, shape index: {}]
  %s5 = inlined_call_operand.hbm [shape: f32[2,1,128], index: 5, kind: output, shape index: {0}]
  %s6 = inlined_call_operand.hbm [shape: f32[2,1,768], index: 6, kind: output, shape index: {1}]
  %s7 = inlined_call_operand.hbm [shape: f32[2,1,768], index: 7, kind: output, shape index: {2}]
  %8 = xla_tuple %s5, %s6, %s7
  %s9 = sld [smem:[#allocation0]]
  $region89: #{tpu_custom_call.1} parent=0
    _
  %s11 = ssub.s32 1, %s9
  %s12 = scalar_select 0, %s11, %s9
  $region1: #{tpu_custom_call.1} parent=0
    #allocation2 [shape = 'u8[196608]{0}', space=vmem, size = 0x30000, scoped, tag = 'input window, operand 1, single buffered']
    #allocation3 [shape = 's32[2]{0}', space=sflag, size = 0x8, scoped, tag = 'scoped memory for tpu_custom_call.1']
    #allocation4 [shape = 's32[2]{0}', space=sflag, size = 0x8, scoped, tag = 'scoped memory for tpu_custom_call.1']
    #allocation5 [shape = 'u8[245760]{0}', space=vmem, size = 0x3c000, scoped, tag = 'input window, operand 3']
    #allocation6 [shape = 's32[2]{0}', space=sflag, size = 0x8, scoped, tag = 'scoped memory for tpu_custom_call.1']
    #allocation7 [shape = 'u8[147456]{0}', space=vmem, size = 0x24000, scoped, tag = 'input window, operand 4']
    #allocation8 [shape = 'u8[1024]{0}', space=vmem, size = 0x400, scoped, tag = 'output window, operand 0']
    #allocation9 [shape = 'u8[6144]{0}', space=vmem, size = 0x1800, scoped, tag = 'output window, operand 1']
    #allocation10 [shape = 's32[2]{0}', space=sflag, size = 0x8, scoped, tag = 'scoped memory for tpu_custom_call.1']
    #allocation11 [shape = 'u8[6144]{0}', space=vmem, size = 0x1800, scoped, tag = 'output window, operand 2']
    %13 = vsyncpa [#allocation3], 0
    %14 = vsyncpa [#allocation6], 0
    %s15 = scalar_lea.sflag [#allocation6], 1
    %16 = vsyncpa %s15, 0
    %17 = vsyncpa [#allocation4], 0
    %s18 = scalar_lea.sflag [#allocation4], 1
    %19 = vsyncpa %s18, 0
    %20 = vsyncpa [#allocation10], 0
    %s21 = scalar_lea.sflag [#allocation10], 1
    %22 = vsyncpa %s21, 0
    loop: start=0, step=1, limit=4
    $region2: #{tpu_custom_call.1} parent=1 // loop_pre_header
      _
    $region3: #{tpu_custom_call.1} parent=1 // loop_header
      %s24 = sphi 0, %s28
      %p25 = scmp.ge.s32.totalorder %s24, 4
      %s31 = sphi 0, %s43
      %s32 = sphi 0, %s39
      %s33 = sphi 0, %s31
      %s34 = sphi 0, %s32
      %s35 = sphi 0, %s33
      %s36 = sphi 0, %s34
      %s46 = sphi 0, %s48
      %s49 = sphi 0, %s46
      %s50 = sphi 0, %s49
      %s66 = sphi 0, %s50
      %s70 = sphi 0, %s70
      %s72 = sphi 0, %s70
      %s73 = sphi 0, %s72
      %s87 = sphi 0, %s73
      %s91 = sphi 0, %s91
      %s93 = sphi 0, %s91
      %s94 = sphi 0, %s93
      %s108 = sphi 0, %s94
      %s120 = sphi 0, %s122
      %s123 = sphi 0, %s120
      %s124 = sphi 0, %s123
      %s140 = sphi 0, %s124
      %s152 = sphi 0, %s154
      %s155 = sphi 0, %s152
      %s156 = sphi 0, %s155
      %s172 = sphi 0, %s156
      %s178 = sphi 0, %s180
      %s181 = sphi 0, %s178
      %s182 = sphi 0, %s181
      %s198 = sphi 0, %s182
      %s204 = sphi 0, %s206
      %s207 = sphi 0, %s204
      %s208 = sphi 0, %s207
      %s224 = sphi 0, %s208
      %s230 = sphi 0, %s232
      %s233 = sphi 0, %s230
      %s234 = sphi 0, %s233
      %s250 = sphi 0, %s234
    $region4: #{tpu_custom_call.1} parent=1 // loop_header_branch
      %27 = sbr.rel (%p25) target = $region8
    $region5: #{tpu_custom_call.1} parent=1 // loop_body
      %s29 = ssub.s32 %s24, 1
      %s30 = ssub.s32 %s24, 2
      %s37 = sadd.s32 1, %s32
      %p38 = scmp.ge.s32.totalorder %s37, 1
      %s39 = scalar_select %p38, 0, %s37
      %s40 = sadd.s32 1, %s31
      %s41 = scalar_select %p38, %s40, %s31
      %p42 = scmp.ge.s32.totalorder %s41, 2
      %s43 = scalar_select %p42, 0, %s41
      %s44 = ssub.s32 %s31, %s43
      %p45 = scmp.eq.s32.totalorder %s44, 0
      %s47 = sadd.s32 %s46, 1
      %s48 = scalar_select %p45, %s46, %s47
      %p51 = pneg %p45
      %p52 = scmp.eq.s32.totalorder %s24, 1
      %p53 = por %p51, %p52
      %p54 = scmp.ne.s32.totalorder %s46, %s49
      %p55 = scmp.eq.s32.totalorder %s24, 0
      %p56 = por %p54, %p55
      %p57 = scmp.ne.s32.totalorder %s46, %s49
      %p58 = scmp.eq.s32.totalorder %s29, 1
      %p59 = por %p57, %p58
      %p60 = scmp.ne.s32.totalorder %s49, %s50
      %p61 = scmp.eq.s32.totalorder %s29, 0
      %p62 = por %p60, %p61
      %p63 = scmp.ne.s32.totalorder %s49, %s50
      %p64 = scmp.eq.s32.totalorder %s30, 1
      %p65 = por %p63, %p64
      %p67 = scmp.ne.s32.totalorder %s50, %s66
      %p68 = scmp.eq.s32.totalorder %s30, 0
      %p69 = por %p67, %p68
      %s71 = sadd.s32 %s70, 1
      %p74 = scmp.eq.s32.totalorder %s24, 1
      %p75 = scmp.ne.s32.totalorder %s70, %s72
      %p76 = scmp.eq.s32.totalorder %s24, 0
      %p77 = por %p75, %p76
      %p78 = scmp.ne.s32.totalorder %s70, %s72
      %p79 = scmp.eq.s32.totalorder %s29, 1
      %p80 = por %p78, %p79
      %p81 = scmp.ne.s32.totalorder %s72, %s73
      %p82 = scmp.eq.s32.totalorder %s29, 0
      %p83 = por %p81, %p82
      %p84 = scmp.ne.s32.totalorder %s72, %s73
      %p85 = scmp.eq.s32.totalorder %s30, 1
      %p86 = por %p84, %p85
      %p88 = scmp.ne.s32.totalorder %s73, %s87
      %p89 = scmp.eq.s32.totalorder %s30, 0
      %p90 = por %p88, %p89
      %s92 = sadd.s32 %s91, 1
      %p95 = scmp.eq.s32.totalorder %s24, 1
      %p96 = scmp.ne.s32.totalorder %s91, %s93
      %p97 = scmp.eq.s32.totalorder %s24, 0
      %p98 = por %p96, %p97
      %p99 = scmp.ne.s32.totalorder %s91, %s93
      %p100 = scmp.eq.s32.totalorder %s29, 1
      %p101 = por %p99, %p100
      %p102 = scmp.ne.s32.totalorder %s93, %s94
      %p103 = scmp.eq.s32.totalorder %s29, 0
      %p104 = por %p102, %p103
      %p105 = scmp.ne.s32.totalorder %s93, %s94
      %p106 = scmp.eq.s32.totalorder %s30, 1
      %p107 = por %p105, %p106
      %p109 = scmp.ne.s32.totalorder %s94, %s108
      %p110 = scmp.eq.s32.totalorder %s30, 0
      %p111 = por %p109, %p110
      %p112 = scmp.lt.s32.totalorder %s32, 0
      %s113 = scalar_select %p112, %s32, 0
      %p114 = scmp.lt.s32.totalorder %s39, 0
      %s115 = scalar_select %p114, %s39, 0
      %s116 = ssub.s32 %s31, %s43
      %s117 = ssub.s32 %s113, %s115
      %s118 = sor.u32 %s116, %s117
      %p119 = scmp.eq.s32.totalorder %s118, 0
      %s121 = sadd.s32 %s120, 1
      %s122 = scalar_select %p119, %s120, %s121
      %p125 = pneg %p119
      %p126 = scmp.eq.s32.totalorder %s24, 1
      %p127 = por %p125, %p126
      %p128 = scmp.ne.s32.totalorder %s120, %s123
      %p129 = scmp.eq.s32.totalorder %s24, 0
      %p130 = por %p128, %p129
      %p131 = scmp.ne.s32.totalorder %s120, %s123
      %p132 = scmp.eq.s32.totalorder %s29, 1
      %p133 = por %p131, %p132
      %p134 = scmp.ne.s32.totalorder %s123, %s124
      %p135 = scmp.eq.s32.totalorder %s29, 0
      %p136 = por %p134, %p135
      %p137 = scmp.ne.s32.totalorder %s123, %s124
      %p138 = scmp.eq.s32.totalorder %s30, 1
      %p139 = por %p137, %p138
      %p141 = scmp.ne.s32.totalorder %s124, %s140
      %p142 = scmp.eq.s32.totalorder %s30, 0
      %p143 = por %p141, %p142
      %p144 = scmp.lt.s32.totalorder %s32, 0
      %s145 = scalar_select %p144, %s32, 0
      %p146 = scmp.lt.s32.totalorder %s39, 0
      %s147 = scalar_select %p146, %s39, 0
      %s148 = ssub.s32 %s31, %s43
      %s149 = ssub.s32 %s145, %s147
      %s150 = sor.u32 %s148, %s149
      %p151 = scmp.eq.s32.totalorder %s150, 0
      %s153 = sadd.s32 %s152, 1
      %s154 = scalar_select %p151, %s152, %s153
      %p157 = pneg %p151
      %p158 = scmp.eq.s32.totalorder %s24, 1
      %p159 = por %p157, %p158
      %p160 = scmp.ne.s32.totalorder %s152, %s155
      %p161 = scmp.eq.s32.totalorder %s24, 0
      %p162 = por %p160, %p161
      %p163 = scmp.ne.s32.totalorder %s152, %s155
      %p164 = scmp.eq.s32.totalorder %s29, 1
      %p165 = por %p163, %p164
      %p166 = scmp.ne.s32.totalorder %s155, %s156
      %p167 = scmp.eq.s32.totalorder %s29, 0
      %p168 = por %p166, %p167
      %p169 = scmp.ne.s32.totalorder %s155, %s156
      %p170 = scmp.eq.s32.totalorder %s30, 1
      %p171 = por %p169, %p170
      %p173 = scmp.ne.s32.totalorder %s156, %s172
      %p174 = scmp.eq.s32.totalorder %s30, 0
      %p175 = por %p173, %p174
      %s176 = ssub.s32 %s31, %s43
      %p177 = scmp.eq.s32.totalorder %s176, 0
      %s179 = sadd.s32 %s178, 1
      %s180 = scalar_select %p177, %s178, %s179
      %p183 = pneg %p177
      %p184 = scmp.eq.s32.totalorder %s24, 1
      %p185 = por %p183, %p184
      %p186 = scmp.ne.s32.totalorder %s178, %s181
      %p187 = scmp.eq.s32.totalorder %s24, 0
      %p188 = por %p186, %p187
      %p189 = scmp.ne.s32.totalorder %s178, %s181
      %p190 = scmp.eq.s32.totalorder %s29, 1
      %p191 = por %p189, %p190
      %p192 = scmp.ne.s32.totalorder %s181, %s182
      %p193 = scmp.eq.s32.totalorder %s29, 0
      %p194 = por %p192, %p193
      %p195 = scmp.ne.s32.totalorder %s181, %s182
      %p196 = scmp.eq.s32.totalorder %s30, 1
      %p197 = por %p195, %p196
      %p199 = scmp.ne.s32.totalorder %s182, %s198
      %p200 = scmp.eq.s32.totalorder %s30, 0
      %p201 = por %p199, %p200
      %s202 = ssub.s32 %s31, %s43
      %p203 = scmp.eq.s32.totalorder %s202, 0
      %s205 = sadd.s32 %s204, 1
      %s206 = scalar_select %p203, %s204, %s205
      %p209 = pneg %p203
      %p210 = scmp.eq.s32.totalorder %s24, 1
      %p211 = por %p209, %p210
      %p212 = scmp.ne.s32.totalorder %s204, %s207
      %p213 = scmp.eq.s32.totalorder %s24, 0
      %p214 = por %p212, %p213
      %p215 = scmp.ne.s32.totalorder %s204, %s207
      %p216 = scmp.eq.s32.totalorder %s29, 1
      %p217 = por %p215, %p216
      %p218 = scmp.ne.s32.totalorder %s207, %s208
      %p219 = scmp.eq.s32.totalorder %s29, 0
      %p220 = por %p218, %p219
      %p221 = scmp.ne.s32.totalorder %s207, %s208
      %p222 = scmp.eq.s32.totalorder %s30, 1
      %p223 = por %p221, %p222
      %p225 = scmp.ne.s32.totalorder %s208, %s224
      %p226 = scmp.eq.s32.totalorder %s30, 0
      %p227 = por %p225, %p226
      %s228 = ssub.s32 %s31, %s43
      %p229 = scmp.eq.s32.totalorder %s228, 0
      %s231 = sadd.s32 %s230, 1
      %s232 = scalar_select %p229, %s230, %s231
      %p235 = pneg %p229
      %p236 = scmp.eq.s32.totalorder %s24, 1
      %p237 = por %p235, %p236
      %p238 = scmp.ne.s32.totalorder %s230, %s233
      %p239 = scmp.eq.s32.totalorder %s24, 0
      %p240 = por %p238, %p239
      %p241 = scmp.ne.s32.totalorder %s230, %s233
      %p242 = scmp.eq.s32.totalorder %s29, 1
      %p243 = por %p241, %p242
      %p244 = scmp.ne.s32.totalorder %s233, %s234
      %p245 = scmp.eq.s32.totalorder %s29, 0
      %p246 = por %p244, %p245
      %p247 = scmp.ne.s32.totalorder %s233, %s234
      %p248 = scmp.eq.s32.totalorder %s30, 1
      %p249 = por %p247, %p248
      %p251 = scmp.ne.s32.totalorder %s234, %s250
      %p252 = scmp.eq.s32.totalorder %s30, 0
      %p253 = por %p251, %p252
      %p254 = scmp.le.s32.totalorder 1, %s24
      %p255 = scmp.lt.s32.totalorder %s24, 3
      %p256 = pnand %p254, %p255
      %p257 = pneg %p256
      // Predicated region
      $region9: #{tpu_custom_call.1} parent=5 // pred_check
        _
      $region10: #{tpu_custom_call.1} parent=5 // pred_check_branch
        %259 = sbr.rel (%p256) target = $region12
      $region11: #{tpu_custom_call.1} parent=5 // pred_region
        %s260 = ssub.s32 %s24, 1
        // Predicated region
        $region13: #{tpu_custom_call.1} parent=11 // pred_check
          %p261 = pneg %p83
        $region14: #{tpu_custom_call.1} parent=11 // pred_check_branch
          %263 = sbr.rel (%p261) target = $region16
        $region15: #{tpu_custom_call.1} parent=11 // pred_region
          %265 = vsyncadd [#allocation3], 0
          %s266 = sshll.u32 %s1, 4
          %s267 = int_to_ptr.hbm [resolvable:$true] %s266
          %s268 = sshll.u32 [#allocation2], 4
          %s269 = int_to_ptr.vmem [resolvable:$true] %s268
          %274 = dma.hbm_to_vmem [thread:$0]  %s267, 6144, %s269, [#allocation3], 64, 64, 4
        $region16: #{tpu_custom_call.1} parent=11 // pred_fallthru
          _
        // Predicated region
        $region17: #{tpu_custom_call.1} parent=11 // pred_check
          %p275 = pneg %p104
        $region18: #{tpu_custom_call.1} parent=11 // pred_check_branch
          %277 = sbr.rel (%p275) target = $region20
        $region19: #{tpu_custom_call.1} parent=11 // pred_region
          _
        $region20: #{tpu_custom_call.1} parent=11 // pred_fallthru
          _
      $region12: #{tpu_custom_call.1} parent=5 // pred_fallthru
        _
      %p278 = scmp.lt.s32.totalorder %s24, 2
      // Predicated region
      $region21: #{tpu_custom_call.1} parent=5 // pred_check
        %p279 = pneg %p278
      $region22: #{tpu_custom_call.1} parent=5 // pred_check_branch
        %281 = sbr.rel (%p279) target = $region24
      $region23: #{tpu_custom_call.1} parent=5 // pred_region
        // Predicated region
        $region25: #{tpu_custom_call.1} parent=23 // pred_check
          %p282 = pneg %p56
        $region26: #{tpu_custom_call.1} parent=23 // pred_check_branch
          %284 = sbr.rel (%p282) target = $region28
        $region27: #{tpu_custom_call.1} parent=23 // pred_region
          %p285 = scmp.lt.s32.totalorder %s31, 1
          %s286 = scalar_select %p285, %s31, 1
          %s287 = smul.addr %s286, 6
          %s288 = scalar_lea.vmem %s0, %s287
        $region28: #{tpu_custom_call.1} parent=23 // pred_fallthru
          _
        // Predicated region
        $region29: #{tpu_custom_call.1} parent=23 // pred_check
          %p289 = pneg %p130
        $region30: #{tpu_custom_call.1} parent=23 // pred_check_branch
          %291 = sbr.rel (%p289) target = $region32
        $region31: #{tpu_custom_call.1} parent=23 // pred_region
          %s292 = sand.u32 %s24, 1
          %s293 = scalar_lea.sflag [#allocation6], %s292
          %s294 = sand.u32 %s120, 1
          %s295 = smul.addr %s294, 240
          %s296 = scalar_lea.vmem [#allocation5], %s295
          %p297 = scmp.lt.s32.totalorder %s32, 0
          %s298 = scalar_select %p297, %s32, 0
          %s299 = smul.u32 5, %s298
          %301 = vsyncadd %s293, 0
          %s302 = smul.addr %s299, 6
          %s303 = smul.addr %s31, 30
          %s304 = sadd.s32 %s302, %s303
          %s305 = smul.addr %s304, 8
          %s306 = scalar_lea.hbm %s3, %s305
          %s307 = sshll.u32 %s306, 4
          %s308 = int_to_ptr.hbm [resolvable:$true] %s307
          %s309 = sshll.u32 %s296, 4
          %s310 = int_to_ptr.vmem [resolvable:$true] %s309
          %315 = dma.hbm_to_vmem [thread:$0]  %s308, 3840, %s310, %s293, 768, 768, 48
        $region32: #{tpu_custom_call.1} parent=23 // pred_fallthru
          _
        // Predicated region
        $region33: #{tpu_custom_call.1} parent=23 // pred_check
          %p316 = pneg %p162
        $region34: #{tpu_custom_call.1} parent=23 // pred_check_branch
          %318 = sbr.rel (%p316) target = $region36
        $region35: #{tpu_custom_call.1} parent=23 // pred_region
          %s319 = sand.u32 %s24, 1
          %s320 = scalar_lea.sflag [#allocation6], %s319
          %s321 = sand.u32 %s152, 1
          %s322 = smul.addr %s321, 144
          %s323 = scalar_lea.vmem [#allocation7], %s322
          %p324 = scmp.lt.s32.totalorder %s32, 0
          %s325 = scalar_select %p324, %s32, 0
          %s326 = smul.u32 3, %s325
          %328 = vsyncadd %s320, 0
          %s329 = smul.addr %s326, 6
          %s330 = smul.addr %s31, 18
          %s331 = sadd.s32 %s329, %s330
          %s332 = smul.addr %s331, 8
          %s333 = scalar_lea.hbm %s4, %s332
          %s334 = sshll.u32 %s333, 4
          %s335 = int_to_ptr.hbm [resolvable:$true] %s334
          %s336 = sshll.u32 %s323, 4
          %s337 = int_to_ptr.vmem [resolvable:$true] %s336
          %342 = dma.hbm_to_vmem [thread:$0]  %s335, 2304, %s337, %s320, 768, 768, 48
        $region36: #{tpu_custom_call.1} parent=23 // pred_fallthru
          _
      $region24: #{tpu_custom_call.1} parent=5 // pred_fallthru
        _
      %p343 = scmp.le.s32.totalorder 1, %s24
      %p344 = scmp.lt.s32.totalorder %s24, 3
      %p345 = pnand %p343, %p344
      %p346 = pneg %p345
      // Predicated region
      $region37: #{tpu_custom_call.1} parent=5 // pred_check
        _
      $region38: #{tpu_custom_call.1} parent=5 // pred_check_branch
        %348 = sbr.rel (%p345) target = $region40
      $region39: #{tpu_custom_call.1} parent=5 // pred_region
        %s349 = ssub.s32 %s24, 1
        // Predicated region
        $region41: #{tpu_custom_call.1} parent=39 // pred_check
          %p350 = pneg %p83
        $region42: #{tpu_custom_call.1} parent=39 // pred_check_branch
          %352 = sbr.rel (%p350) target = $region44
        $region43: #{tpu_custom_call.1} parent=39 // pred_region
          %354 = dma.done [#allocation3], 6144
        $region44: #{tpu_custom_call.1} parent=39 // pred_fallthru
          _
        %s355 = sand.u32 %s29, 1
        %s356 = scalar_lea.sflag [#allocation6], %s355
        %s357 = sand.u32 %s123, 1
        %s358 = smul.addr %s357, 240
        %s359 = scalar_lea.vmem [#allocation5], %s358
        // Predicated region
        $region45: #{tpu_custom_call.1} parent=39 // pred_check
          %p360 = pneg %p136
        $region46: #{tpu_custom_call.1} parent=39 // pred_check_branch
          %362 = sbr.rel (%p360) target = $region48
        $region47: #{tpu_custom_call.1} parent=39 // pred_region
          %364 = dma.done %s356, 3840
        $region48: #{tpu_custom_call.1} parent=39 // pred_fallthru
          _
        %s365 = sand.u32 %s29, 1
        %s366 = scalar_lea.sflag [#allocation6], %s365
        %s367 = sand.u32 %s155, 1
        %s368 = smul.addr %s367, 144
        %s369 = scalar_lea.vmem [#allocation7], %s368
        // Predicated region
        $region49: #{tpu_custom_call.1} parent=39 // pred_check
          %p370 = pneg %p168
        $region50: #{tpu_custom_call.1} parent=39 // pred_check_branch
          %372 = sbr.rel (%p370) target = $region52
        $region51: #{tpu_custom_call.1} parent=39 // pred_region
          %374 = dma.done %s366, 2304
        $region52: #{tpu_custom_call.1} parent=39 // pred_fallthru
          _
        %p375 = scmp.lt.s32.totalorder %s33, 1
        %s376 = scalar_select %p375, %s33, 1
        %s377 = smul.addr %s376, 6
        %s378 = scalar_lea.vmem %s0, %s377
        %p379 = pneg %p62
        %p380 = pneg %p59
        %p381 = pneg %p83
        %p382 = pneg %p80
        %p383 = pneg %p104
        %p384 = pneg %p101
        %s385 = sand.u32 %s29, 1
        %s386 = scalar_lea.sflag [#allocation6], %s385
        %s387 = sand.u32 %s123, 1
        %s388 = smul.addr %s387, 240
        %s389 = scalar_lea.vmem [#allocation5], %s388
        %p390 = pneg %p136
        %p391 = pneg %p133
        %s392 = sand.u32 %s29, 1
        %s393 = scalar_lea.sflag [#allocation6], %s392
        %s394 = sand.u32 %s155, 1
        %s395 = smul.addr %s394, 144
        %s396 = scalar_lea.vmem [#allocation7], %s395
        %p397 = pneg %p168
        %p398 = pneg %p165
        %p399 = pneg %p194
        %p400 = pneg %p191
        %s401 = sand.u32 %s181, 1
        %s402 = scalar_lea.sflag [#allocation4], %s401
        %s403 = sand.u32 %s181, 1
        %s404 = scalar_lea.vmem [#allocation8], %s403
        %p405 = pneg %p220
        %p406 = pneg %p217
        %s407 = sand.u32 %s29, 1
        %s408 = scalar_lea.sflag [#allocation10], %s407
        %s409 = sand.u32 %s207, 1
        %s410 = smul.addr %s409, 6
        %s411 = scalar_lea.vmem [#allocation9], %s410
        %p412 = pneg %p246
        %p413 = pneg %p243
        %s414 = sand.u32 %s29, 1
        %s415 = scalar_lea.sflag [#allocation10], %s414
        %s416 = sand.u32 %s233, 1
        %s417 = smul.addr %s416, 6
        %s418 = scalar_lea.vmem [#allocation11], %s417
        %p419 = scmp.lt.s32.totalorder %s33, 1
        %s420 = scalar_select %p419, %s33, 1
        %s421 = smul.addr %s420, 6
        %s422 = scalar_lea.vmem %s0, %s421
        %p423 = scmp.lt.s32.totalorder %s34, 0
        %s424 = scalar_select %p423, %s34, 0
        %s425 = smul.u32 5, %s424
        %p426 = scmp.lt.s32.totalorder %s34, 0
        %s427 = scalar_select %p426, %s34, 0
        %s428 = smul.u32 3, %s427
        %p429 = scmp.eq.s32.totalorder %s34, 0
        // Predicated region
        $region53: #{tpu_custom_call.1} parent=39 // pred_check
          %p430 = pneg %p429
        $region54: #{tpu_custom_call.1} parent=39 // pred_check_branch
          %432 = sbr.rel (%p430) target = $region56
        $region55: #{tpu_custom_call.1} parent=39 // pred_region
          %v433 = vlaneseq
          %vm434 = vcmp.ge.s32.totalorder %v433, 0
          %vm435 = vcmp.lt.s32.totalorder %v433, 768
          %vm436 = vmand %vm434, %vm435
          %437 = vst.msk [vmem:[%s411] sm:$0x3f] %vm436, 0.0
          %438 = vst.msk [vmem:[%s418] sm:$0x3f] %vm436, 0.0
          %v439 = vld [vmem:[%s422] sm:$0x3f]
          %v440 = vld [vmem:[#allocation2] sm:$0xf]
          %v441 = vld [vmem:[#allocation2 + $0x4] sm:$0xf]
          %v442 = vld [vmem:[#allocation2 + $0x8] sm:$0xf]
          %v443 = vld [vmem:[#allocation2 + $0xc] sm:$0xf]
          %v444 = vld [vmem:[#allocation2 + $0x10] sm:$0xf]
          %v445 = vld [vmem:[#allocation2 + $0x14] sm:$0xf]
          %v446 = vld [vmem:[#allocation2 + $0x18] sm:$0xf]
          %v447 = vld [vmem:[#allocation2 + $0x1c] sm:$0xf]
          %v448 = vld [vmem:[#allocation2 + $0x20] sm:$0xf]
          %v449 = vld [vmem:[#allocation2 + $0x24] sm:$0xf]
          %v450 = vld [vmem:[#allocation2 + $0x28] sm:$0xf]
          %v451 = vld [vmem:[#allocation2 + $0x2c] sm:$0xf]
          %v452 = vld [vmem:[#allocation2 + $0x30] sm:$0xf]
          %v453 = vld [vmem:[#allocation2 + $0x34] sm:$0xf]
          %v454 = vld [vmem:[#allocation2 + $0x38] sm:$0xf]
          %v455 = vld [vmem:[#allocation2 + $0x3c] sm:$0xf]
          %v456 = vld [vmem:[#allocation2 + $0x40] sm:$0xf]
          %v457 = vld [vmem:[#allocation2 + $0x44] sm:$0xf]
          %v458 = vld [vmem:[#allocation2 + $0x48] sm:$0xf]
          %v459 = vld [vmem:[#allocation2 + $0x4c] sm:$0xf]
          %v460 = vld [vmem:[#allocation2 + $0x50] sm:$0xf]
          %v461 = vld [vmem:[#allocation2 + $0x54] sm:$0xf]
          %v462 = vld [vmem:[#allocation2 + $0x58] sm:$0xf]
          %v463 = vld [vmem:[#allocation2 + $0x5c] sm:$0xf]
          %v464 = vld [vmem:[#allocation2 + $0x60] sm:$0xf]
          %v465 = vld [vmem:[#allocation2 + $0x64] sm:$0xf]
          %v466 = vld [vmem:[#allocation2 + $0x68] sm:$0xf]
          %v467 = vld [vmem:[#allocation2 + $0x6c] sm:$0xf]
          %v468 = vld [vmem:[#allocation2 + $0x70] sm:$0xf]
          %v469 = vld [vmem:[#allocation2 + $0x74] sm:$0xf]
          %v470 = vld [vmem:[#allocation2 + $0x78] sm:$0xf]
          %v471 = vld [vmem:[#allocation2 + $0x7c] sm:$0xf]
          %v472 = vld [vmem:[#allocation2 + $0x80] sm:$0xf]
          %v473 = vld [vmem:[#allocation2 + $0x84] sm:$0xf]
          %v474 = vld [vmem:[#allocation2 + $0x88] sm:$0xf]
          %v475 = vld [vmem:[#allocation2 + $0x8c] sm:$0xf]
          %v476 = vld [vmem:[#allocation2 + $0x90] sm:$0xf]
          %v477 = vld [vmem:[#allocation2 + $0x94] sm:$0xf]
          %v478 = vld [vmem:[#allocation2 + $0x98] sm:$0xf]
          %v479 = vld [vmem:[#allocation2 + $0x9c] sm:$0xf]
          %v480 = vld [vmem:[#allocation2 + $0xa0] sm:$0xf]
          %v481 = vld [vmem:[#allocation2 + $0xa4] sm:$0xf]
          %v482 = vld [vmem:[#allocation2 + $0xa8] sm:$0xf]
          %v483 = vld [vmem:[#allocation2 + $0xac] sm:$0xf]
          %v484 = vld [vmem:[#allocation2 + $0xb0] sm:$0xf]
          %v485 = vld [vmem:[#allocation2 + $0xb4] sm:$0xf]
          %v486 = vld [vmem:[#allocation2 + $0xb8] sm:$0xf]
          %v487 = vld [vmem:[#allocation2 + $0xbc] sm:$0xf]
          %v488 = vld [vmem:[#allocation2 + $0xc0] sm:$0xf]
          %v489 = vld [vmem:[#allocation2 + $0xc4] sm:$0xf]
          %v490 = vld [vmem:[#allocation2 + $0xc8] sm:$0xf]
          %v491 = vld [vmem:[#allocation2 + $0xcc] sm:$0xf]
          %v492 = vld [vmem:[#allocation2 + $0xd0] sm:$0xf]
          %v493 = vld [vmem:[#allocation2 + $0xd4] sm:$0xf]
          %v494 = vld [vmem:[#allocation2 + $0xd8] sm:$0xf]
          %v495 = vld [vmem:[#allocation2 + $0xdc] sm:$0xf]
          %v496 = vld [vmem:[#allocation2 + $0xe0] sm:$0xf]
          %v497 = vld [vmem:[#allocation2 + $0xe4] sm:$0xf]
          %v498 = vld [vmem:[#allocation2 + $0xe8] sm:$0xf]
          %v499 = vld [vmem:[#allocation2 + $0xec] sm:$0xf]
          %v500 = vld [vmem:[#allocation2 + $0xf0] sm:$0xf]
          %v501 = vld [vmem:[#allocation2 + $0xf4] sm:$0xf]
          %v502 = vld [vmem:[#allocation2 + $0xf8] sm:$0xf]
          %v503 = vld [vmem:[#allocation2 + $0xfc] sm:$0xf]
          %v504 = vld [vmem:[#allocation2 + $0x100] sm:$0xf]
          %v505 = vld [vmem:[#allocation2 + $0x104] sm:$0xf]
          %v506 = vld [vmem:[#allocation2 + $0x108] sm:$0xf]
          %v507 = vld [vmem:[#allocation2 + $0x10c] sm:$0xf]
          %v508 = vld [vmem:[#allocation2 + $0x110] sm:$0xf]
          %v509 = vld [vmem:[#allocation2 + $0x114] sm:$0xf]
          %v510 = vld [vmem:[#allocation2 + $0x118] sm:$0xf]
          %v511 = vld [vmem:[#allocation2 + $0x11c] sm:$0xf]
          %v512 = vld [vmem:[#allocation2 + $0x120] sm:$0xf]
          %v513 = vld [vmem:[#allocation2 + $0x124] sm:$0xf]
          %v514 = vld [vmem:[#allocation2 + $0x128] sm:$0xf]
          %v515 = vld [vmem:[#allocation2 + $0x12c] sm:$0xf]
          %v516 = vld [vmem:[#allocation2 + $0x130] sm:$0xf]
          %v517 = vld [vmem:[#allocation2 + $0x134] sm:$0xf]
          %v518 = vld [vmem:[#allocation2 + $0x138] sm:$0xf]
          %v519 = vld [vmem:[#allocation2 + $0x13c] sm:$0xf]
          %v520 = vld [vmem:[#allocation2 + $0x140] sm:$0xf]
          %v521 = vld [vmem:[#allocation2 + $0x144] sm:$0xf]
          %v522 = vld [vmem:[#allocation2 + $0x148] sm:$0xf]
          %v523 = vld [vmem:[#allocation2 + $0x14c] sm:$0xf]
          %v524 = vld [vmem:[#allocation2 + $0x150] sm:$0xf]
          %v525 = vld [vmem:[#allocation2 + $0x154] sm:$0xf]
          %v526 = vld [vmem:[#allocation2 + $0x158] sm:$0xf]
          %v527 = vld [vmem:[#allocation2 + $0x15c] sm:$0xf]
          %v528 = vld [vmem:[#allocation2 + $0x160] sm:$0xf]
          %v529 = vld [vmem:[#allocation2 + $0x164] sm:$0xf]
          %v530 = vld [vmem:[#allocation2 + $0x168] sm:$0xf]
          %v531 = vld [vmem:[#allocation2 + $0x16c] sm:$0xf]
          %v532 = vld [vmem:[#allocation2 + $0x170] sm:$0xf]
          %v533 = vld [vmem:[#allocation2 + $0x174] sm:$0xf]
          %v534 = vld [vmem:[#allocation2 + $0x178] sm:$0xf]
          %v535 = vld [vmem:[#allocation2 + $0x17c] sm:$0xf]
          %v536 = vld [vmem:[%s2] sm:$0x1]
          %538 = vst [vmem:[#allocation1] ss:$9 sm:$0xff] %v439
          %v539 = vld [vmem:[#allocation1] sm:$0xff]
          %v540 = vld [vmem:[#allocation1 + $0x9] sm:$0xff]
          %v541 = vld [vmem:[#allocation1 + $0x12] sm:$0xff]
          %v542 = vld [vmem:[#allocation1 + $0x1b] sm:$0xff]
          %v543 = vld [vmem:[#allocation1 + $0x24] sm:$0xff]
          %v544 = vld [vmem:[#allocation1 + $0x2d] sm:$0xff]
          %v647 = vunpack.c.l.b16 %v440
          %v648 = vunpack.c.l.b16 %v441
          %v649 = vunpack.c.l.b16 %v442
          %v650 = vunpack.c.l.b16 %v443
          %v651 = vunpack.c.l.b16 %v444
          %v652 = vunpack.c.l.b16 %v445
          %v653 = vunpack.c.l.b16 %v446
          %v654 = vunpack.c.l.b16 %v447
          %v655 = vunpack.c.l.b16 %v448
          %v656 = vunpack.c.l.b16 %v449
          %v657 = vunpack.c.l.b16 %v450
          %v658 = vunpack.c.l.b16 %v451
          %v659 = vunpack.c.l.b16 %v452
          %v660 = vunpack.c.l.b16 %v453
          %v661 = vunpack.c.l.b16 %v454
          %v662 = vunpack.c.l.b16 %v455
          %v663 = vunpack.c.l.b16 %v456
          %v664 = vunpack.c.l.b16 %v457
          %v665 = vunpack.c.l.b16 %v458
          %v666 = vunpack.c.l.b16 %v459
          %v667 = vunpack.c.l.b16 %v460
          %v668 = vunpack.c.l.b16 %v461
          %v669 = vunpack.c.l.b16 %v462
          %v670 = vunpack.c.l.b16 %v463
          %v671 = vunpack.c.l.b16 %v464
          %v672 = vunpack.c.l.b16 %v465
          %v673 = vunpack.c.l.b16 %v466
          %v674 = vunpack.c.l.b16 %v467
          %v675 = vunpack.c.l.b16 %v468
          %v676 = vunpack.c.l.b16 %v469
          %v677 = vunpack.c.l.b16 %v470
          %v678 = vunpack.c.l.b16 %v471
          %v679 = vunpack.c.l.b16 %v472
          %v680 = vunpack.c.l.b16 %v473
          %v681 = vunpack.c.l.b16 %v474
          %v682 = vunpack.c.l.b16 %v475
          %v683 = vunpack.c.l.b16 %v476
          %v684 = vunpack.c.l.b16 %v477
          %v685 = vunpack.c.l.b16 %v478
          %v686 = vunpack.c.l.b16 %v479
          %v687 = vunpack.c.l.b16 %v480
          %v688 = vunpack.c.l.b16 %v481
          %v689 = vunpack.c.l.b16 %v482
          %v690 = vunpack.c.l.b16 %v483
          %v691 = vunpack.c.l.b16 %v484
          %v692 = vunpack.c.l.b16 %v485
          %v693 = vunpack.c.l.b16 %v486
          %v694 = vunpack.c.l.b16 %v487
          %v695 = vunpack.c.l.b16 %v488
          %v696 = vunpack.c.l.b16 %v489
          %v697 = vunpack.c.l.b16 %v490
          %v698 = vunpack.c.l.b16 %v491
          %v699 = vunpack.c.l.b16 %v492
          %v700 = vunpack.c.l.b16 %v493
          %v701 = vunpack.c.l.b16 %v494
          %v702 = vunpack.c.l.b16 %v495
          %v703 = vunpack.c.l.b16 %v496
          %v704 = vunpack.c.l.b16 %v497
          %v705 = vunpack.c.l.b16 %v498
          %v706 = vunpack.c.l.b16 %v499
          %v707 = vunpack.c.l.b16 %v500
          %v708 = vunpack.c.l.b16 %v501
          %v709 = vunpack.c.l.b16 %v502
          %v710 = vunpack.c.l.b16 %v503
          %v711 = vunpack.c.l.b16 %v504
          %v712 = vunpack.c.l.b16 %v505
          %v713 = vunpack.c.l.b16 %v506
          %v714 = vunpack.c.l.b16 %v507
          %v715 = vunpack.c.l.b16 %v508
          %v716 = vunpack.c.l.b16 %v509
          %v717 = vunpack.c.l.b16 %v510
          %v718 = vunpack.c.l.b16 %v511
          %v719 = vunpack.c.l.b16 %v512
          %v720 = vunpack.c.l.b16 %v513
          %v721 = vunpack.c.l.b16 %v514
          %v722 = vunpack.c.l.b16 %v515
          %v723 = vunpack.c.l.b16 %v516
          %v724 = vunpack.c.l.b16 %v517
          %v725 = vunpack.c.l.b16 %v518
          %v726 = vunpack.c.l.b16 %v519
          %v727 = vunpack.c.l.b16 %v520
          %v728 = vunpack.c.l.b16 %v521
          %v729 = vunpack.c.l.b16 %v522
          %v730 = vunpack.c.l.b16 %v523
          %v731 = vunpack.c.l.b16 %v524
          %v732 = vunpack.c.l.b16 %v525
          %v733 = vunpack.c.l.b16 %v526
          %v734 = vunpack.c.l.b16 %v527
          %v735 = vunpack.c.l.b16 %v528
          %v736 = vunpack.c.l.b16 %v529
          %v737 = vunpack.c.l.b16 %v530
          %v738 = vunpack.c.l.b16 %v531
          %v739 = vunpack.c.l.b16 %v532
          %v740 = vunpack.c.l.b16 %v533
          %v741 = vunpack.c.l.b16 %v534
          %v742 = vunpack.c.l.b16 %v535
          %v743 = vpack.c.b16 %v648, %v647
          %v744 = vpack.c.b16 %v650, %v649
          %v745 = vpack.c.b16 %v652, %v651
          %v746 = vpack.c.b16 %v654, %v653
          %v747 = vpack.c.b16 %v656, %v655
          %v748 = vpack.c.b16 %v658, %v657
          %v749 = vpack.c.b16 %v660, %v659
          %v750 = vpack.c.b16 %v662, %v661
          %v751 = vpack.c.b16 %v664, %v663
          %v752 = vpack.c.b16 %v666, %v665
          %v753 = vpack.c.b16 %v668, %v667
          %v754 = vpack.c.b16 %v670, %v669
          %v755 = vpack.c.b16 %v672, %v671
          %v756 = vpack.c.b16 %v674, %v673
          %v757 = vpack.c.b16 %v676, %v675
          %v758 = vpack.c.b16 %v678, %v677
          %v759 = vpack.c.b16 %v680, %v679
          %v760 = vpack.c.b16 %v682, %v681
          %v761 = vpack.c.b16 %v684, %v683
          %v762 = vpack.c.b16 %v686, %v685
          %v763 = vpack.c.b16 %v688, %v687
          %v764 = vpack.c.b16 %v690, %v689
          %v765 = vpack.c.b16 %v692, %v691
          %v766 = vpack.c.b16 %v694, %v693
          %v767 = vpack.c.b16 %v696, %v695
          %v768 = vpack.c.b16 %v698, %v697
          %v769 = vpack.c.b16 %v700, %v699
          %v770 = vpack.c.b16 %v702, %v701
          %v771 = vpack.c.b16 %v704, %v703
          %v772 = vpack.c.b16 %v706, %v705
          %v773 = vpack.c.b16 %v708, %v707
          %v774 = vpack.c.b16 %v710, %v709
          %v775 = vpack.c.b16 %v712, %v711
          %v776 = vpack.c.b16 %v714, %v713
          %v777 = vpack.c.b16 %v716, %v715
          %v778 = vpack.c.b16 %v718, %v717
          %v779 = vpack.c.b16 %v720, %v719
          %v780 = vpack.c.b16 %v722, %v721
          %v781 = vpack.c.b16 %v724, %v723
          %v782 = vpack.c.b16 %v726, %v725
          %v783 = vpack.c.b16 %v728, %v727
          %v784 = vpack.c.b16 %v730, %v729
          %v785 = vpack.c.b16 %v732, %v731
          %v786 = vpack.c.b16 %v734, %v733
          %v787 = vpack.c.b16 %v736, %v735
          %v788 = vpack.c.b16 %v738, %v737
          %v789 = vpack.c.b16 %v740, %v739
          %v790 = vpack.c.b16 %v742, %v741
          %839 = vmatpush.bf16.msra.mxu0 %v750
          %840 = vmatpush.bf16.msra.mxu0 %v749
          %841 = vmatpush.bf16.msra.mxu0 %v748
          %842 = vmatpush.bf16.msra.mxu0 %v747
          %843 = vmatpush.bf16.msra.mxu0 %v746
          %844 = vmatpush.bf16.msra.mxu0 %v745
          %845 = vmatpush.bf16.msra.mxu0 %v744
          %846 = vmatpush.bf16.msra.mxu0 %v743
          %847 = vmatmul.bf16.gmra.mxu0 %v539
          %v848 = vpop.f32.mrf.mxu0
          %v849 = vadd.f32 %v536, %v848
          %v850 = vpop.f32.mrf.mxu0
          %851 = vdwg.mxu0
          %852 = vmatpush.bf16.msra.mxu0 %v758
          %853 = vmatpush.bf16.msra.mxu0 %v757
          %854 = vmatpush.bf16.msra.mxu0 %v756
          %855 = vmatpush.bf16.msra.mxu0 %v755
          %856 = vmatpush.bf16.msra.mxu0 %v754
          %857 = vmatpush.bf16.msra.mxu0 %v753
          %858 = vmatpush.bf16.msra.mxu0 %v752
          %859 = vmatpush.bf16.msra.mxu0 %v751
          %860 = vmatmul.bf16.gmra.mxu0 %v540
          %v861 = vpop.f32.mrf.mxu0
          %v862 = vadd.f32 %v849, %v861
          %v863 = vpop.f32.mrf.mxu0
          %864 = vdwg.mxu0
          %865 = vmatpush.bf16.msra.mxu0 %v766
          %866 = vmatpush.bf16.msra.mxu0 %v765
          %867 = vmatpush.bf16.msra.mxu0 %v764
          %868 = vmatpush.bf16.msra.mxu0 %v763
          %869 = vmatpush.bf16.msra.mxu0 %v762
          %870 = vmatpush.bf16.msra.mxu0 %v761
          %871 = vmatpush.bf16.msra.mxu0 %v760
          %872 = vmatpush.bf16.msra.mxu0 %v759
          %873 = vmatmul.bf16.gmra.mxu0 %v541
          %v874 = vpop.f32.mrf.mxu0
          %v875 = vadd.f32 %v862, %v874
          %v876 = vpop.f32.mrf.mxu0
          %877 = vdwg.mxu0
          %878 = vmatpush.bf16.msra.mxu0 %v774
          %879 = vmatpush.bf16.msra.mxu0 %v773
          %880 = vmatpush.bf16.msra.mxu0 %v772
          %881 = vmatpush.bf16.msra.mxu0 %v771
          %882 = vmatpush.bf16.msra.mxu0 %v770
          %883 = vmatpush.bf16.msra.mxu0 %v769
          %884 = vmatpush.bf16.msra.mxu0 %v768
          %885 = vmatpush.bf16.msra.mxu0 %v767
          %886 = vmatmul.bf16.gmra.mxu0 %v542
          %v887 = vpop.f32.mrf.mxu0
          %v888 = vadd.f32 %v875, %v887
          %v889 = vpop.f32.mrf.mxu0
          %890 = vdwg.mxu0
          %891 = vmatpush.bf16.msra.mxu0 %v782
          %892 = vmatpush.bf16.msra.mxu0 %v781
          %893 = vmatpush.bf16.msra.mxu0 %v780
          %894 = vmatpush.bf16.msra.mxu0 %v779
          %895 = vmatpush.bf16.msra.mxu0 %v778
          %896 = vmatpush.bf16.msra.mxu0 %v777
          %897 = vmatpush.bf16.msra.mxu0 %v776
          %898 = vmatpush.bf16.msra.mxu0 %v775
          %899 = vmatmul.bf16.gmra.mxu0 %v543
          %v900 = vpop.f32.mrf.mxu0
          %v901 = vadd.f32 %v888, %v900
          %v902 = vpop.f32.mrf.mxu0
          %903 = vdwg.mxu0
          %904 = vmatpush.bf16.msra.mxu0 %v790
          %905 = vmatpush.bf16.msra.mxu0 %v789
          %906 = vmatpush.bf16.msra.mxu0 %v788
          %907 = vmatpush.bf16.msra.mxu0 %v787
          %908 = vmatpush.bf16.msra.mxu0 %v786
          %909 = vmatpush.bf16.msra.mxu0 %v785
          %910 = vmatpush.bf16.msra.mxu0 %v784
          %911 = vmatpush.bf16.msra.mxu0 %v783
          %912 = vmatmul.bf16.gmra.mxu0 %v544
          %v913 = vpop.f32.mrf.mxu0
          %v914 = vadd.f32 %v901, %v913
          %v915 = vpop.f32.mrf.mxu0
          %916 = vdwg.mxu0
          %917 = vst [vmem:[%s404] sm:$0x1] %v914
        $region56: #{tpu_custom_call.1} parent=39 // pred_fallthru
          _
        %v918 = vld [vmem:[%s359] sm:$0xff]
        %v919 = vld [vmem:[%s359 + $0x8] sm:$0xff]
        %v920 = vld [vmem:[%s359 + $0x10] sm:$0xff]
        %v921 = vld [vmem:[%s359 + $0x18] sm:$0xff]
        %v922 = vld [vmem:[%s359 + $0x20] sm:$0xff]
        %v923 = vld [vmem:[%s359 + $0x28] sm:$0xff]
        %v924 = vld [vmem:[%s359 + $0x30] sm:$0xff]
        %v925 = vld [vmem:[%s359 + $0x38] sm:$0xff]
        %v926 = vld [vmem:[%s359 + $0x40] sm:$0xff]
        %v927 = vld [vmem:[%s359 + $0x48] sm:$0xff]
        %v928 = vld [vmem:[%s359 + $0x50] sm:$0xff]
        %v929 = vld [vmem:[%s359 + $0x58] sm:$0xff]
        %v930 = vld [vmem:[%s359 + $0x60] sm:$0xff]
        %v931 = vld [vmem:[%s359 + $0x68] sm:$0xff]
        %v932 = vld [vmem:[%s359 + $0x70] sm:$0xff]
        %v933 = vld [vmem:[%s359 + $0x78] sm:$0xff]
        %v934 = vld [vmem:[%s359 + $0x80] sm:$0xff]
        %v935 = vld [vmem:[%s359 + $0x88] sm:$0xff]
        %v936 = vld [vmem:[%s359 + $0x90] sm:$0xff]
        %v937 = vld [vmem:[%s359 + $0x98] sm:$0xff]
        %v938 = vld [vmem:[%s359 + $0xa0] sm:$0xff]
        %v939 = vld [vmem:[%s359 + $0xa8] sm:$0xff]
        %v940 = vld [vmem:[%s359 + $0xb0] sm:$0xff]
        %v941 = vld [vmem:[%s359 + $0xb8] sm:$0xff]
        %v942 = vld [vmem:[%s359 + $0xc0] sm:$0xff]
        %v943 = vld [vmem:[%s359 + $0xc8] sm:$0xff]
        %v944 = vld [vmem:[%s359 + $0xd0] sm:$0xff]
        %v945 = vld [vmem:[%s359 + $0xd8] sm:$0xff]
        %v946 = vld [vmem:[%s359 + $0xe0] sm:$0xff]
        %v947 = vld [vmem:[%s359 + $0xe8] sm:$0xff]
        %v948 = vld [vmem:[%s411] sm:$0x3f]
        %v949 = vadd.f32 %v918, %v924
        %v950 = vadd.f32 %v949, %v930
        %v951 = vadd.f32 %v950, %v936
        %v952 = vadd.f32 %v951, %v942
        %v953 = vrot.slane %v952, 4
        %v954 = vadd.f32 %v952, %v953
        %v955 = vrot.slane %v954, 2
        %v956 = vadd.f32 %v954, %v955
        %v957 = vrot.slane %v956, 1
        %v958 = vadd.f32 %v956, %v957
        %v959 = vadd.f32 %v919, %v925
        %v960 = vadd.f32 %v959, %v931
        %v961 = vadd.f32 %v960, %v937
        %v962 = vadd.f32 %v961, %v943
        %v963 = vrot.slane %v962, 4
        %v964 = vadd.f32 %v962, %v963
        %v965 = vrot.slane %v964, 2
        %v966 = vadd.f32 %v964, %v965
        %v967 = vrot.slane %v966, 1
        %v968 = vadd.f32 %v966, %v967
        %v969 = vadd.f32 %v920, %v926
        %v970 = vadd.f32 %v969, %v932
        %v971 = vadd.f32 %v970, %v938
        %v972 = vadd.f32 %v971, %v944
        %v973 = vrot.slane %v972, 4
        %v974 = vadd.f32 %v972, %v973
        %v975 = vrot.slane %v974, 2
        %v976 = vadd.f32 %v974, %v975
        %v977 = vrot.slane %v976, 1
        %v978 = vadd.f32 %v976, %v977
        %v979 = vadd.f32 %v921, %v927
        %v980 = vadd.f32 %v979, %v933
        %v981 = vadd.f32 %v980, %v939
        %v982 = vadd.f32 %v981, %v945
        %v983 = vrot.slane %v982, 4
        %v984 = vadd.f32 %v982, %v983
        %v985 = vrot.slane %v984, 2
        %v986 = vadd.f32 %v984, %v985
        %v987 = vrot.slane %v986, 1
        %v988 = vadd.f32 %v986, %v987
        %v989 = vadd.f32 %v922, %v928
        %v990 = vadd.f32 %v989, %v934
        %v991 = vadd.f32 %v990, %v940
        %v992 = vadd.f32 %v991, %v946
        %v993 = vrot.slane %v992, 4
        %v994 = vadd.f32 %v992, %v993
        %v995 = vrot.slane %v994, 2
        %v996 = vadd.f32 %v994, %v995
        %v997 = vrot.slane %v996, 1
        %v998 = vadd.f32 %v996, %v997
        %v999 = vadd.f32 %v923, %v929
        %v1000 = vadd.f32 %v999, %v935
        %v1001 = vadd.f32 %v1000, %v941
        %v1002 = vadd.f32 %v1001, %v947
        %v1003 = vrot.slane %v1002, 4
        %v1004 = vadd.f32 %v1002, %v1003
        %v1005 = vrot.slane %v1004, 2
        %v1006 = vadd.f32 %v1004, %v1005
        %v1007 = vrot.slane %v1006, 1
        %v1008 = vadd.f32 %v1006, %v1007
        %v1015 = vrot.slane %v968, 7
        %v1016 = vrot.slane %v978, 6
        %v1017 = vrot.slane %v988, 5
        %v1018 = vrot.slane %v998, 4
        %v1019 = vrot.slane %v1008, 3
        %vm1020 = vcmask 1040384
        %v1021 = vsel %vm1020, %v958, %v1015
        %vm1022 = vcmask 1041408
        %v1023 = vsel %vm1022, %v1021, %v1016
        %vm1024 = vcmask 1043459
        %v1025 = vsel %vm1024, %v1017, %v1018
        %vm1026 = vcmask 1044483
        %v1027 = vsel %vm1026, %v1025, %v1019
        %vm1028 = vcmask 1042432
        %v1029 = vsel %vm1028, %v1023, %v1027
        %v1031 = vadd.f32 %v948, %v1029
        %v1032 = vlaneseq
        %vm1033 = vcmp.ge.s32.totalorder %v1032, 0
        %vm1034 = vcmp.lt.s32.totalorder %v1032, 768
        %vm1035 = vmand %vm1033, %vm1034
        %1036 = vst.msk [vmem:[%s411] sm:$0x3f] %vm1035, %v1031
        %v1037 = vld [vmem:[%s369] sm:$0xff]
        %v1038 = vld [vmem:[%s369 + $0x8] sm:$0xff]
        %v1039 = vld [vmem:[%s369 + $0x10] sm:$0xff]
        %v1040 = vld [vmem:[%s369 + $0x18] sm:$0xff]
        %v1041 = vld [vmem:[%s369 + $0x20] sm:$0xff]
        %v1042 = vld [vmem:[%s369 + $0x28] sm:$0xff]
        %v1043 = vld [vmem:[%s369 + $0x30] sm:$0xff]
        %v1044 = vld [vmem:[%s369 + $0x38] sm:$0xff]
        %v1045 = vld [vmem:[%s369 + $0x40] sm:$0xff]
        %v1046 = vld [vmem:[%s369 + $0x48] sm:$0xff]
        %v1047 = vld [vmem:[%s369 + $0x50] sm:$0xff]
        %v1048 = vld [vmem:[%s369 + $0x58] sm:$0xff]
        %v1049 = vld [vmem:[%s369 + $0x60] sm:$0xff]
        %v1050 = vld [vmem:[%s369 + $0x68] sm:$0xff]
        %v1051 = vld [vmem:[%s369 + $0x70] sm:$0xff]
        %v1052 = vld [vmem:[%s369 + $0x78] sm:$0xff]
        %v1053 = vld [vmem:[%s369 + $0x80] sm:$0xff]
        %v1054 = vld [vmem:[%s369 + $0x88] sm:$0xff]
        %v1055 = vld [vmem:[%s418] sm:$0x3f]
        %v1056 = vadd.f32 %v1037, %v1043
        %v1057 = vadd.f32 %v1056, %v1049
        %v1058 = vrot.slane %v1057, 4
        %v1059 = vadd.f32 %v1057, %v1058
        %v1060 = vrot.slane %v1059, 2
        %v1061 = vadd.f32 %v1059, %v1060
        %v1062 = vrot.slane %v1061, 1
        %v1063 = vadd.f32 %v1061, %v1062
        %v1064 = vadd.f32 %v1038, %v1044
        %v1065 = vadd.f32 %v1064, %v1050
        %v1066 = vrot.slane %v1065, 4
        %v1067 = vadd.f32 %v1065, %v1066
        %v1068 = vrot.slane %v1067, 2
        %v1069 = vadd.f32 %v1067, %v1068
        %v1070 = vrot.slane %v1069, 1
        %v1071 = vadd.f32 %v1069, %v1070
        %v1072 = vadd.f32 %v1039, %v1045
        %v1073 = vadd.f32 %v1072, %v1051
        %v1074 = vrot.slane %v1073, 4
        %v1075 = vadd.f32 %v1073, %v1074
        %v1076 = vrot.slane %v1075, 2
        %v1077 = vadd.f32 %v1075, %v1076
        %v1078 = vrot.slane %v1077, 1
        %v1079 = vadd.f32 %v1077, %v1078
        %v1080 = vadd.f32 %v1040, %v1046
        %v1081 = vadd.f32 %v1080, %v1052
        %v1082 = vrot.slane %v1081, 4
        %v1083 = vadd.f32 %v1081, %v1082
        %v1084 = vrot.slane %v1083, 2
        %v1085 = vadd.f32 %v1083, %v1084
        %v1086 = vrot.slane %v1085, 1
        %v1087 = vadd.f32 %v1085, %v1086
        %v1088 = vadd.f32 %v1041, %v1047
        %v1089 = vadd.f32 %v1088, %v1053
        %v1090 = vrot.slane %v1089, 4
        %v1091 = vadd.f32 %v1089, %v1090
        %v1092 = vrot.slane %v1091, 2
        %v1093 = vadd.f32 %v1091, %v1092
        %v1094 = vrot.slane %v1093, 1
        %v1095 = vadd.f32 %v1093, %v1094
        %v1096 = vadd.f32 %v1042, %v1048
        %v1097 = vadd.f32 %v1096, %v1054
        %v1098 = vrot.slane %v1097, 4
        %v1099 = vadd.f32 %v1097, %v1098
        %v1100 = vrot.slane %v1099, 2
        %v1101 = vadd.f32 %v1099, %v1100
        %v1102 = vrot.slane %v1101, 1
        %v1103 = vadd.f32 %v1101, %v1102
        %v1110 = vrot.slane %v1071, 7
        %v1111 = vrot.slane %v1079, 6
        %v1112 = vrot.slane %v1087, 5
        %v1113 = vrot.slane %v1095, 4
        %v1114 = vrot.slane %v1103, 3
        %v1115 = vsel %vm1020, %v1063, %v1110
        %v1116 = vsel %vm1022, %v1115, %v1111
        %v1117 = vsel %vm1024, %v1112, %v1113
        %v1118 = vsel %vm1026, %v1117, %v1114
        %v1119 = vsel %vm1028, %v1116, %v1118
        %v1121 = vadd.f32 %v1055, %v1119
        %1122 = vst.msk [vmem:[%s418] sm:$0x3f] %vm1035, %v1121
        // Predicated region
        $region57: #{tpu_custom_call.1} parent=39 // pred_check
          %p1123 = pneg %p429
        $region58: #{tpu_custom_call.1} parent=39 // pred_check_branch
          %1125 = sbr.rel (%p1123) target = $region60
        $region59: #{tpu_custom_call.1} parent=39 // pred_region
          %v1126 = vld [vmem:[%s411] sm:$0x3f]
          %v1127 = vmul.f32 %v1126, 0.025
          %1128 = vst.msk [vmem:[%s411] sm:$0x3f] %vm1035, %v1127
          %v1129 = vld [vmem:[%s418] sm:$0x3f]
          %v1130 = vmul.f32 %v1129, 0.041666668
          %1131 = vst.msk [vmem:[%s418] sm:$0x3f] %vm1035, %v1130
        $region60: #{tpu_custom_call.1} parent=39 // pred_fallthru
          _
        %s1132 = sand.u32 %s181, 1
        %s1133 = scalar_lea.sflag [#allocation4], %s1132
        %s1134 = sand.u32 %s181, 1
        %s1135 = scalar_lea.vmem [#allocation8], %s1134
        %s1136 = sand.u32 %s29, 1
        %s1137 = scalar_lea.sflag [#allocation10], %s1136
        %s1138 = sand.u32 %s207, 1
        %s1139 = smul.addr %s1138, 6
        %s1140 = scalar_lea.vmem [#allocation9], %s1139
        %s1141 = sand.u32 %s29, 1
        %s1142 = scalar_lea.sflag [#allocation10], %s1141
        %s1143 = sand.u32 %s233, 1
        %s1144 = smul.addr %s1143, 6
        %s1145 = scalar_lea.vmem [#allocation11], %s1144
        // Predicated region
        $region61: #{tpu_custom_call.1} parent=39 // pred_check
          %p1146 = pneg %p191
        $region62: #{tpu_custom_call.1} parent=39 // pred_check_branch
          %1148 = sbr.rel (%p1146) target = $region64
        $region63: #{tpu_custom_call.1} parent=39 // pred_region
          %1150 = vsyncadd %s1133, 0
          %s1151 = scalar_lea.hbm %s5, %s33
          %s1153 = sshll.u32 %s1135, 4
          %s1154 = int_to_ptr.vmem [resolvable:$true] %s1153
          %s1155 = sshll.u32 %s1151, 4
          %s1156 = int_to_ptr.hbm [resolvable:$true] %s1155
          %1158 = dma.vmem_to_hbm [thread:$0]  %s1154, 16, %s1156, %s1133
        $region64: #{tpu_custom_call.1} parent=39 // pred_fallthru
          _
        // Predicated region
        $region65: #{tpu_custom_call.1} parent=39 // pred_check
          %p1159 = pneg %p217
        $region66: #{tpu_custom_call.1} parent=39 // pred_check_branch
          %1161 = sbr.rel (%p1159) target = $region68
        $region67: #{tpu_custom_call.1} parent=39 // pred_region
          %1163 = vsyncadd %s1137, 0
          %s1164 = smul.addr %s33, 6
          %s1165 = scalar_lea.hbm %s6, %s1164
          %s1167 = sshll.u32 %s1140, 4
          %s1168 = int_to_ptr.vmem [resolvable:$true] %s1167
          %s1169 = sshll.u32 %s1165, 4
          %s1170 = int_to_ptr.hbm [resolvable:$true] %s1169
          %1172 = dma.vmem_to_hbm [thread:$0]  %s1168, 96, %s1170, %s1137
        $region68: #{tpu_custom_call.1} parent=39 // pred_fallthru
          _
        // Predicated region
        $region69: #{tpu_custom_call.1} parent=39 // pred_check
          %p1173 = pneg %p243
        $region70: #{tpu_custom_call.1} parent=39 // pred_check_branch
          %1175 = sbr.rel (%p1173) target = $region72
        $region71: #{tpu_custom_call.1} parent=39 // pred_region
          %1177 = vsyncadd %s1142, 0
          %s1178 = smul.addr %s33, 6
          %s1179 = scalar_lea.hbm %s7, %s1178
          %s1181 = sshll.u32 %s1145, 4
          %s1182 = int_to_ptr.vmem [resolvable:$true] %s1181
          %s1183 = sshll.u32 %s1179, 4
          %s1184 = int_to_ptr.hbm [resolvable:$true] %s1183
          %1186 = dma.vmem_to_hbm [thread:$0]  %s1182, 96, %s1184, %s1142
        $region72: #{tpu_custom_call.1} parent=39 // pred_fallthru
          _
      $region40: #{tpu_custom_call.1} parent=5 // pred_fallthru
        _
      %p1187 = scmp.le.s32.totalorder 2, %s24
      // Predicated region
      $region73: #{tpu_custom_call.1} parent=5 // pred_check
        %p1188 = pneg %p1187
      $region74: #{tpu_custom_call.1} parent=5 // pred_check_branch
        %1190 = sbr.rel (%p1188) target = $region76
      $region75: #{tpu_custom_call.1} parent=5 // pred_region
        %s1191 = ssub.s32 %s24, 2
        // Predicated region
        $region77: #{tpu_custom_call.1} parent=75 // pred_check
          %p1192 = pneg %p197
        $region78: #{tpu_custom_call.1} parent=75 // pred_check_branch
          %1194 = sbr.rel (%p1192) target = $region80
        $region79: #{tpu_custom_call.1} parent=75 // pred_region
          %s1195 = sand.u32 %s182, 1
          %s1196 = scalar_lea.sflag [#allocation4], %s1195
          %s1197 = sand.u32 %s182, 1
          %s1198 = scalar_lea.vmem [#allocation8], %s1197
          %1200 = dma.done %s1196, 16
        $region80: #{tpu_custom_call.1} parent=75 // pred_fallthru
          _
        // Predicated region
        $region81: #{tpu_custom_call.1} parent=75 // pred_check
          %p1201 = pneg %p223
        $region82: #{tpu_custom_call.1} parent=75 // pred_check_branch
          %1203 = sbr.rel (%p1201) target = $region84
        $region83: #{tpu_custom_call.1} parent=75 // pred_region
          %s1204 = sand.u32 %s30, 1
          %s1205 = scalar_lea.sflag [#allocation10], %s1204
          %s1206 = sand.u32 %s208, 1
          %s1207 = smul.addr %s1206, 6
          %s1208 = scalar_lea.vmem [#allocation9], %s1207
          %1210 = dma.done %s1205, 96
        $region84: #{tpu_custom_call.1} parent=75 // pred_fallthru
          _
        // Predicated region
        $region85: #{tpu_custom_call.1} parent=75 // pred_check
          %p1211 = pneg %p249
        $region86: #{tpu_custom_call.1} parent=75 // pred_check_branch
          %1213 = sbr.rel (%p1211) target = $region88
        $region87: #{tpu_custom_call.1} parent=75 // pred_region
          %s1214 = sand.u32 %s30, 1
          %s1215 = scalar_lea.sflag [#allocation10], %s1214
          %s1216 = sand.u32 %s234, 1
          %s1217 = smul.addr %s1216, 6
          %s1218 = scalar_lea.vmem [#allocation11], %s1217
          %1220 = dma.done %s1215, 96
        $region88: #{tpu_custom_call.1} parent=75 // pred_fallthru
          _
      $region76: #{tpu_custom_call.1} parent=5 // pred_fallthru
        _
    $region6: #{tpu_custom_call.1} parent=1 // loop_footer
      %s28 = sadd.s32 1, %s24
    $region7: #{tpu_custom_call.1} parent=1 // loop_footer_branch
      %23 = sbr.rel target = $region3
    $region8: #{tpu_custom_call.1} parent=1 // loop_exit
      _
    %1221 = vsyncpa [#allocation3], 1
    %s1222 = scalar_lea.sflag [#allocation3], 1
    %1223 = vsyncpa %s1222, 1
    %1224 = vsyncpa [#allocation6], 1
    %s1225 = scalar_lea.sflag [#allocation6], 1
    %1226 = vsyncpa %s1225, 1
    %1227 = vsyncpa [#allocation4], 1
    %s1228 = scalar_lea.sflag [#allocation4], 1
    %1229 = vsyncpa %s1228, 1
    %1230 = vsyncpa [#allocation10], 1
    %s1231 = scalar_lea.sflag [#allocation10], 1
    %1232 = vsyncpa %s1231, 1

</llo_original>
